<compile_context>
chip_gen: v5e
topology: v5e:2x2
jax: 0.10.0
libtpu: 0.0.40
codegen_flags: <defaults>
</compile_context>

<pallas_src>
import jax
import jax.numpy as jnp
from jax import lax
from jax.experimental import pallas as pl
from jax.experimental.pallas import tpu as pltpu
import numpy as np

EPS = 1e-5


# --------------------------------------------------------------------------
# Kernels
# --------------------------------------------------------------------------
def _conv_stats_kernel(w_ref, p_ref, conv_ref, stats_ref):
    """Pass 1: channel-major MXU matmul + streaming per-channel sum / sumsq.

    w_ref:     (C_pad, K_pad)  compute dtype
    p_ref:     (K_pad, TM)     compute dtype
    conv_ref:  (C_pad, TM)     f32
    stats_ref: (2*C_pad, 128)  f32 resident per-core accumulator
               rows [0:C_pad]   = per-lane partial sums
               rows [C_pad: ]   = per-lane partial sums of squares
    """
    c_pad = conv_ref.shape[0]
    tm = conv_ref.shape[1]

    @pl.when(pl.program_id(1) == 0)
    def _():
        stats_ref[...] = jnp.zeros_like(stats_ref)

    conv = jnp.dot(w_ref[...], p_ref[...], preferred_element_type=jnp.float32)
    conv_ref[...] = conv

    # Per-lane partial sums: VPU adds over whole-vreg 128-lane slices (no XLU
    # cross-lane reduce, no concatenate).  Wrapper finishes the reduction over
    # the 128 lanes (and over cores) in f32.
    s_part = stats_ref[0:c_pad, :]
    q_part = stats_ref[c_pad:, :]
    for j in range(tm // 128):
        blk = conv[:, j * 128:(j + 1) * 128]
        s_part = s_part + blk
        q_part = q_part + blk * blk
    stats_ref[0:c_pad, :] = s_part
    stats_ref[c_pad:, :] = q_part


def _bn_relu_kernel(conv_ref, scale_ref, shift_ref, out_ref):
    """Pass 2: fused BN affine + ReLU (all f32, channel-major)."""
    scale = scale_ref[:, 0:1]                       # (C_pad, 1), lane-broadcast
    shift = shift_ref[:, 0:1]
    out_ref[...] = jnp.maximum(conv_ref[...] * scale + shift, 0.0)


# --------------------------------------------------------------------------
# Wrapper
# --------------------------------------------------------------------------
def _round_up(x, m):
    return (x + m - 1) // m * m


def _im2col_t(x_pad, KH, KW, stride):
    """(N, C, Hp, Wp) -> transposed patches (C*KH*KW, N*Ho*Wo), plus (Ho, Wo).

    k-index ordering is c*KH*KW + kh*KW + kw, matching weight.reshape(Cout, -1).
    """
    N, C, Hp, Wp = x_pad.shape
    Ho = (Hp - KH) // stride + 1
    Wo = (Wp - KW) // stride + 1
    cols = []
    for i in range(KH):
        for j in range(KW):
            cols.append(x_pad[:, :, i:i + (Ho - 1) * stride + 1:stride,
                                    j:j + (Wo - 1) * stride + 1:stride])
    patches = jnp.stack(cols, axis=0)               # (KH*KW, N, C, Ho, Wo)
    patches = patches.transpose(2, 0, 1, 3, 4)      # (C, KH*KW, N, Ho, Wo)
    return patches.reshape(C * KH * KW, N * Ho * Wo), Ho, Wo


def basic_conv_forward(x, weight, bias, gamma, beta, *, stride=1, padding=(1, 0),
                       tm=1024, compute_dtype=jnp.bfloat16):
    """x: (N, Cin, H, W) f32 NCHW.  Returns (N, Cout, Ho, Wo) f32.

    `bias` is accepted for parity with nn.Conv2d(bias=True) but unused:
    training-mode BatchNorm subtracts the per-channel mean, so a per-channel
    constant added before BN cancels exactly.
    """
    del bias
    N, Cin, H, W = x.shape
    Cout, _, KH, KW = weight.shape
    ph, pw = padding

    # --- wrapper-side im2col: cast first, build directly transposed --------
    x_c = x.astype(compute_dtype)
    x_pad = jnp.pad(x_c, ((0, 0), (0, 0), (ph, ph), (pw, pw)))
    patches_t, Ho, Wo = _im2col_t(x_pad, KH, KW, stride)       # (K, M)
    K, M = patches_t.shape

    itemsize = jnp.dtype(compute_dtype).itemsize
    k_align = 16 if itemsize == 2 else 8            # bf16 sublane packing
    K_pad = _round_up(K, k_align)
    C_pad = _round_up(Cout, 8)                      # narrow channel-major rows
    TM = _round_up(min(tm, _round_up(M, 128)), 128)

    n_tiles = pl.cdiv(M, TM)
    n_cores = 2 if n_tiles >= 2 else 1              # v7x megacore split
    n_tiles = _round_up(n_tiles, n_cores)
    n_per_core = n_tiles // n_cores
    M_pad = n_tiles * TM

    patches_p = jnp.pad(patches_t, ((0, K_pad - K), (0, M_pad - M)))
    w_t = weight.reshape(Cout, Cin * KH * KW)
    w_p = jnp.pad(w_t, ((0, C_pad - Cout), (0, K_pad - K))).astype(compute_dtype)

    vmem_limit = 32 * 1024 * 1024                   # tiny per-step footprint anyway

    # ---- Pass 1: conv matmul + streaming BN statistics --------------------
    cost1 = pl.CostEstimate(
        flops=int(2 * M_pad * K_pad * C_pad + 3 * M_pad * C_pad),
        transcendentals=0,
        bytes_accessed=int(M_pad * K_pad * itemsize + C_pad * K_pad * itemsize
                           + M_pad * C_pad * 4 + n_cores * 2 * C_pad * 128 * 4))
    conv_t, stats = pl.pallas_call(
        _conv_stats_kernel,
        out_shape=(jax.ShapeDtypeStruct((C_pad, M_pad), jnp.float32),
                   jax.ShapeDtypeStruct((n_cores * 2 * C_pad, 128), jnp.float32)),
        grid_spec=pltpu.PrefetchScalarGridSpec(
            num_scalar_prefetch=0,
            grid=(n_cores, n_per_core),
            in_specs=[pl.BlockSpec((C_pad, K_pad), lambda p, i: (0, 0)),
                      pl.BlockSpec((K_pad, TM),
                                   lambda p, i: (0, p * n_per_core + i))],
            out_specs=[pl.BlockSpec((C_pad, TM),
                                    lambda p, i: (0, p * n_per_core + i)),
                       pl.BlockSpec((2 * C_pad, 128), lambda p, i: (p, 0))]),
        compiler_params=pltpu.CompilerParams(
            dimension_semantics=("parallel", "arbitrary"),
            vmem_limit_bytes=vmem_limit),
        cost_estimate=cost1,
    )(w_p, patches_p)

    # ---- BN stats -> per-channel scale/shift (strictly f32) ---------------
    # Zero-padded M columns / channel rows contribute 0 to both sums, so we
    # divide by the real M.
    totals = jnp.sum(stats.reshape(n_cores, 2 * C_pad, 128), axis=(0, 2))
    m_real = jnp.float32(M)
    mean = totals[:C_pad] / m_real
    # NOTE: E[x^2]-E[x]^2 in f32 is cancellation-prone for huge M / large means;
    # fine at these sizes, switch to a shifted two-pass variance for production.
    var = jnp.maximum(totals[C_pad:] / m_real - mean * mean, 0.0)  # biased var
    inv_std = lax.rsqrt(var + EPS)
    gamma_p = jnp.pad(gamma.astype(jnp.float32), (0, C_pad - Cout))
    beta_p = jnp.pad(beta.astype(jnp.float32), (0, C_pad - Cout))
    scale = gamma_p * inv_std
    shift = beta_p - mean * scale
    scale_l = jnp.broadcast_to(scale[:, None], (C_pad, 128))
    shift_l = jnp.broadcast_to(shift[:, None], (C_pad, 128))

    # ---- Pass 2: normalize + ReLU (narrow, lane-dense, fully parallel) ----
    cost2 = pl.CostEstimate(
        flops=int(3 * M_pad * C_pad),
        transcendentals=0,
        bytes_accessed=int(2 * M_pad * C_pad * 4 + 2 * C_pad * 128 * 4))
    out_t = pl.pallas_call(
        _bn_relu_kernel,
        out_shape=jax.ShapeDtypeStruct((C_pad, M_pad), jnp.float32),
        grid_spec=pltpu.PrefetchScalarGridSpec(
            num_scalar_prefetch=0,
            grid=(n_tiles,),
            in_specs=[pl.BlockSpec((C_pad, TM), lambda i: (0, i)),
                      pl.BlockSpec((C_pad, 128), lambda i: (0, 0)),
                      pl.BlockSpec((C_pad, 128), lambda i: (0, 0))],
            out_specs=pl.BlockSpec((C_pad, TM), lambda i: (0, i))),
        compiler_params=pltpu.CompilerParams(
            dimension_semantics=("parallel",),
            vmem_limit_bytes=vmem_limit),
        cost_estimate=cost2,
    )(conv_t, scale_l, shift_l)

    # Channel-major -> NCHW: output is already channel-major, one cheap move.
    out = out_t[:Cout, :M].reshape(Cout, N, Ho, Wo).transpose(1, 0, 2, 3)
    return out


# --------------------------------------------------------------------------
# Reference (pure JAX, matches the PyTorch module incl. the conv bias)
# --------------------------------------------------------------------------
def _reference(x, weight, bias, gamma, beta, *, stride=1, padding=(1, 0)):
    conv = lax.conv_general_dilated(
        x, weight, window_strides=(stride, stride),
        padding=((padding[0], padding[0]), (padding[1], padding[1])),
        dimension_numbers=("NCHW", "OIHW", "NCHW"))
    conv = conv + bias[None, :, None, None]
    mean = jnp.mean(conv, axis=(0, 2, 3), keepdims=True)
    var = jnp.mean((conv - mean) ** 2, axis=(0, 2, 3), keepdims=True)
    y = (conv - mean) * lax.rsqrt(var + EPS)
    y = y * gamma[None, :, None, None] + beta[None, :, None, None]
    return jnp.maximum(y, 0.0)


if __name__ == "__main__":
    # BasicConv(in_planes=4, out_planes=8, kernel_size=3) -> stride=1, padding=(1,0)
    N, Cin, H, W = 2, 4, 16, 16
    Cout, KH, KW = 8, 3, 3

    key = jax.random.PRNGKey(0)
    k_x, k_w, k_b, k_g, k_be = jax.random.split(key, 5)
    x = jax.random.normal(k_x, (N, Cin, H, W), dtype=jnp.float32)
    weight = jax.random.normal(k_w, (Cout, Cin, KH, KW), dtype=jnp.float32) * 0.1
    bias = jax.random.normal(k_b, (Cout,), dtype=jnp.float32) * 0.1
    gamma = 1.0 + 0.1 * jax.random.normal(k_g, (Cout,), dtype=jnp.float32)
    beta = 0.1 * jax.random.normal(k_be, (Cout,), dtype=jnp.float32)

    fwd = jax.jit(basic_conv_forward,
                  static_argnames=("stride", "padding", "tm", "compute_dtype"))

    ref = jax.block_until_ready(_reference(x, weight, bias, gamma, beta))

    # Performance path: bf16 MXU inputs, f32 accumulation / BN math.
    out_bf16 = jax.block_until_ready(
        fwd(x, weight, bias, gamma, beta, compute_dtype=jnp.bfloat16))
    assert out_bf16.shape == (N, Cout, H, W - 2), out_bf16.shape
    # Loose tolerance only because the matmul inputs are bf16.
    np.testing.assert_allclose(np.asarray(out_bf16), np.asarray(ref),
                               atol=5e-2, rtol=5e-2)

    # Exactness check of the tiled / streaming-BN algorithm in f32.
    out_f32 = jax.block_until_ready(
        fwd(x, weight, bias, gamma, beta, compute_dtype=jnp.float32))
    np.testing.assert_allclose(np.asarray(out_f32), np.asarray(ref),
                               atol=1e-3, rtol=1e-3)

    print("KERNEL_OK")
</pallas_src>

<mosaic_0001>
module attributes {stable_mosaic.version = 11 : i64} {
  func.func @_conv_stats_kernel(%arg0: i32, %arg1: i32, %arg2: memref<8x48xbf16, #tpu.memory_space<vmem>>, %arg3: memref<48x512xbf16, #tpu.memory_space<vmem>>, %arg4: memref<8x512xf32, #tpu.memory_space<vmem>>, %arg5: memref<16x128xf32, #tpu.memory_space<vmem>>) attributes {dimension_semantics = [#tpu.dimension_semantics<parallel>, #tpu.dimension_semantics<arbitrary>], iteration_bounds = array<i64: 1, 1>, scalar_prefetch = 0 : i64, scratch_operands = 0 : i64, tpu.core_type = #tpu.core_type<tc>, window_params = [{pipeline_mode = #tpu.pipeline_mode<synchronous>, transform_indices = @transform_0, window_bounds = array<i64: 8, 48>}, {transform_indices = @transform_1, window_bounds = array<i64: 48, 512>}, {transform_indices = @transform_2, window_bounds = array<i64: 8, 512>}, {transform_indices = @transform_3, window_bounds = array<i64: 16, 128>}]} {
    %c0_i32 = arith.constant 0 : i32
    %0 = arith.cmpi eq, %arg1, %c0_i32 : i32
    %1 = arith.extui %0 : i1 to i32
    %c0_i32_0 = arith.constant 0 : i32
    %2 = arith.cmpi ne, %1, %c0_i32_0 : i32
    scf.if %2 {
      %cst_13 = arith.constant 0.000000e+00 : f32
      %27 = vector.broadcast %cst_13 : f32 to vector<16x128xf32>
      %c0_14 = arith.constant 0 : index
      %c0_15 = arith.constant 0 : index
      %28 = vector.load %arg5[%c0_14, %c0_15] : memref<16x128xf32, #tpu.memory_space<vmem>>, vector<16x128xf32>
      tpu.vector_store %arg5[%c0_14, %c0_15], %27 {strides = array<i32>} : memref<16x128xf32, #tpu.memory_space<vmem>>, vector<16x128xf32>,
    } else {
    }
    %c0 = arith.constant 0 : index
    %c0_1 = arith.constant 0 : index
    %3 = vector.load %arg2[%c0, %c0_1] : memref<8x48xbf16, #tpu.memory_space<vmem>>, vector<8x48xbf16>
    %c0_2 = arith.constant 0 : index
    %c0_3 = arith.constant 0 : index
    %4 = vector.load %arg3[%c0_2, %c0_3] : memref<48x512xbf16, #tpu.memory_space<vmem>>, vector<48x512xbf16>
    %cst = arith.constant dense<0.000000e+00> : vector<8x512xf32>
    %5 = tpu.matmul %3, %4, %cst {dimension_numbers = #tpu.dot_dimension_numbers<[1], [0], [0], [1], [0, 0, 1, 1], [], []>} : vector<8x48xbf16>, vector<48x512xbf16>, vector<8x512xf32> -> vector<8x512xf32>
    %c0_4 = arith.constant 0 : index
    %c0_5 = arith.constant 0 : index
    %6 = vector.load %arg4[%c0_4, %c0_5] : memref<8x512xf32, #tpu.memory_space<vmem>>, vector<8x512xf32>
    tpu.vector_store %arg4[%c0_4, %c0_5], %5 {strides = array<i32>} : memref<8x512xf32, #tpu.memory_space<vmem>>, vector<8x512xf32>,
    %c0_6 = arith.constant 0 : index
    %c0_7 = arith.constant 0 : index
    %7 = vector.load %arg5[%c0_6, %c0_7] : memref<16x128xf32, #tpu.memory_space<vmem>>, vector<8x128xf32>
    %c8 = arith.constant 8 : index
    %c0_8 = arith.constant 0 : index
    %8 = vector.load %arg5[%c8, %c0_8] : memref<16x128xf32, #tpu.memory_space<vmem>>, vector<8x128xf32>
    %9 = vector.extract_strided_slice %5 {offsets = [0, 0], sizes = [8, 128], strides = [1, 1]} : vector<8x512xf32> to vector<8x128xf32>
    %10 = arith.addf %7, %9 : vector<8x128xf32>
    %11 = arith.mulf %9, %9 : vector<8x128xf32>
    %12 = arith.addf %8, %11 : vector<8x128xf32>
    %13 = vector.extract_strided_slice %5 {offsets = [0, 128], sizes = [8, 128], strides = [1, 1]} : vector<8x512xf32> to vector<8x128xf32>
    %14 = arith.addf %10, %13 : vector<8x128xf32>
    %15 = arith.mulf %13, %13 : vector<8x128xf32>
    %16 = arith.addf %12, %15 : vector<8x128xf32>
    %17 = vector.extract_strided_slice %5 {offsets = [0, 256], sizes = [8, 128], strides = [1, 1]} : vector<8x512xf32> to vector<8x128xf32>
    %18 = arith.addf %14, %17 : vector<8x128xf32>
    %19 = arith.mulf %17, %17 : vector<8x128xf32>
    %20 = arith.addf %16, %19 : vector<8x128xf32>
    %21 = vector.extract_strided_slice %5 {offsets = [0, 384], sizes = [8, 128], strides = [1, 1]} : vector<8x512xf32> to vector<8x128xf32>
    %22 = arith.addf %18, %21 : vector<8x128xf32>
    %23 = arith.mulf %21, %21 : vector<8x128xf32>
    %24 = arith.addf %20, %23 : vector<8x128xf32>
    %c0_9 = arith.constant 0 : index
    %c0_10 = arith.constant 0 : index
    %25 = vector.load %arg5[%c0_9, %c0_10] : memref<16x128xf32, #tpu.memory_space<vmem>>, vector<8x128xf32>
    tpu.vector_store %arg5[%c0_9, %c0_10], %22 {strides = array<i32>} : memref<16x128xf32, #tpu.memory_space<vmem>>, vector<8x128xf32>,
    %c8_11 = arith.constant 8 : index
    %c0_12 = arith.constant 0 : index
    %26 = vector.load %arg5[%c8_11, %c0_12] : memref<16x128xf32, #tpu.memory_space<vmem>>, vector<8x128xf32>
    tpu.vector_store %arg5[%c8_11, %c0_12], %24 {strides = array<i32>} : memref<16x128xf32, #tpu.memory_space<vmem>>, vector<8x128xf32>,
    return
  }
  func.func @transform_0(%arg0: i32, %arg1: i32) -> (i32, i32) {
    %c0_i32 = arith.constant 0 : i32
    %c0_i32_0 = arith.constant 0 : i32
    %c0_i32_1 = arith.constant 0 : i32
    return %c0_i32, %c0_i32_0 : i32, i32
  }
  func.func @transform_1(%arg0: i32, %arg1: i32) -> (i32, i32) {
    %c1_i32 = arith.constant 1 : i32
    %0 = arith.muli %arg0, %c1_i32 : i32
    %1 = arith.addi %0, %arg1 : i32
    %c0_i32 = arith.constant 0 : i32
    %c0_i32_0 = arith.constant 0 : i32
    return %c0_i32, %1 : i32, i32
  }
  func.func @transform_2(%arg0: i32, %arg1: i32) -> (i32, i32) {
    %c1_i32 = arith.constant 1 : i32
    %0 = arith.muli %arg0, %c1_i32 : i32
    %1 = arith.addi %0, %arg1 : i32
    %c0_i32 = arith.constant 0 : i32
    %c0_i32_0 = arith.constant 0 : i32
    return %c0_i32, %1 : i32, i32
  }
  func.func @transform_3(%arg0: i32, %arg1: i32) -> (i32, i32) {
    %c0_i32 = arith.constant 0 : i32
    %c0_i32_0 = arith.constant 0 : i32
    return %arg0, %c0_i32 : i32, i32
  }
}

module attributes {stable_mosaic.version = 11 : i64} {
  func.func @_bn_relu_kernel(%arg0: i32, %arg1: memref<8x512xf32, #tpu.memory_space<vmem>>, %arg2: memref<8x128xf32, #tpu.memory_space<vmem>>, %arg3: memref<8x128xf32, #tpu.memory_space<vmem>>, %arg4: memref<8x512xf32, #tpu.memory_space<vmem>>) attributes {dimension_semantics = [#tpu.dimension_semantics<parallel>], iteration_bounds = array<i64: 1>, scalar_prefetch = 0 : i64, scratch_operands = 0 : i64, tpu.core_type = #tpu.core_type<tc>, window_params = [{transform_indices = @transform_0, window_bounds = array<i64: 8, 512>}, {pipeline_mode = #tpu.pipeline_mode<synchronous>, transform_indices = @transform_1, window_bounds = array<i64: 8, 128>}, {pipeline_mode = #tpu.pipeline_mode<synchronous>, transform_indices = @transform_2, window_bounds = array<i64: 8, 128>}, {transform_indices = @transform_3, window_bounds = array<i64: 8, 512>}]} {
    %c0 = arith.constant 0 : index
    %c0_0 = arith.constant 0 : index
    %0 = vector.load %arg2[%c0, %c0_0] : memref<8x128xf32, #tpu.memory_space<vmem>>, vector<8x1xf32>
    %c0_1 = arith.constant 0 : index
    %c0_2 = arith.constant 0 : index
    %1 = vector.load %arg3[%c0_1, %c0_2] : memref<8x128xf32, #tpu.memory_space<vmem>>, vector<8x1xf32>
    %c0_3 = arith.constant 0 : index
    %c0_4 = arith.constant 0 : index
    %2 = vector.load %arg1[%c0_3, %c0_4] : memref<8x512xf32, #tpu.memory_space<vmem>>, vector<8x512xf32>
    %3 = vector.broadcast %0 : vector<8x1xf32> to vector<8x512xf32>
    %4 = arith.mulf %2, %3 : vector<8x512xf32>
    %5 = vector.broadcast %1 : vector<8x1xf32> to vector<8x512xf32>
    %6 = arith.addf %4, %5 : vector<8x512xf32>
    %cst = arith.constant 0.000000e+00 : f32
    %7 = vector.broadcast %cst : f32 to vector<8x512xf32>
    %8 = arith.maximumf %6, %7 : vector<8x512xf32>
    %c0_5 = arith.constant 0 : index
    %c0_6 = arith.constant 0 : index
    %9 = vector.load %arg4[%c0_5, %c0_6] : memref<8x512xf32, #tpu.memory_space<vmem>>, vector<8x512xf32>
    tpu.vector_store %arg4[%c0_5, %c0_6], %8 {strides = array<i32>} : memref<8x512xf32, #tpu.memory_space<vmem>>, vector<8x512xf32>,
    return
  }
  func.func @transform_0(%arg0: i32) -> (i32, i32) {
    %c0_i32 = arith.constant 0 : i32
    %c0_i32_0 = arith.constant 0 : i32
    return %c0_i32, %arg0 : i32, i32
  }
  func.func @transform_1(%arg0: i32) -> (i32, i32) {
    %c0_i32 = arith.constant 0 : i32
    %c0_i32_0 = arith.constant 0 : i32
    %c0_i32_1 = arith.constant 0 : i32
    return %c0_i32, %c0_i32_0 : i32, i32
  }
  func.func @transform_2(%arg0: i32) -> (i32, i32) {
    %c0_i32 = arith.constant 0 : i32
    %c0_i32_0 = arith.constant 0 : i32
    %c0_i32_1 = arith.constant 0 : i32
    return %c0_i32, %c0_i32_0 : i32, i32
  }
  func.func @transform_3(%arg0: i32) -> (i32, i32) {
    %c0_i32 = arith.constant 0 : i32
    %c0_i32_0 = arith.constant 0 : i32
    return %c0_i32, %arg0 : i32, i32
  }
}

</mosaic_0001>

<llo_original>
// kernel: basic_conv_forward.3
$region0: #{basic_conv_forward.3}
  #allocation0 [shape = 'u32[]', space=smem, size = 0x4, offset = 0x4, fixed_abs, tag = 'smem constant byte address 0x4 - core index']
  #allocation1 [shape = 'u32[72,128]{1,0:T(1,128)}', space=vmem, size = 0x9000, scoped, tag = 'internal scratch']
  %s0 = inlined_call_operand.vmem [shape: f32[8,512], index: 0, kind: input, shape index: {}]
  %s1 = inlined_call_operand.vmem [shape: f32[8,128], index: 1, kind: input, shape index: {}]
  %s2 = inlined_call_operand.vmem [shape: f32[8,128], index: 2, kind: input, shape index: {}]
  %s3 = inlined_call_operand.vmem [shape: f32[8,512], index: 3, kind: output, shape index: {}]
  %s4 = sld [smem:[#allocation0]]
  $region22: #{basic_conv_forward.3} parent=0
    _
  %s6 = ssub.s32 1, %s4
  %s7 = scalar_select 0, %s6, %s4
  // Predicated region
  $region2: #{basic_conv_forward.3} parent=0 // pred_check
    _
  $region3: #{basic_conv_forward.3} parent=0 // pred_check_branch
    %9 = sbr.rel (0) target = $region5
  $region4: #{basic_conv_forward.3} parent=0 // pred_region
    _
  $region5: #{basic_conv_forward.3} parent=0 // pred_fallthru
    _
  // Predicated region
  $region6: #{basic_conv_forward.3} parent=0 // pred_check
    _
  $region7: #{basic_conv_forward.3} parent=0 // pred_check_branch
    %11 = sbr.rel (0) target = $region9
  $region8: #{basic_conv_forward.3} parent=0 // pred_region
    _
  $region9: #{basic_conv_forward.3} parent=0 // pred_fallthru
    _
  // Predicated region
  $region10: #{basic_conv_forward.3} parent=0 // pred_check
    _
  $region11: #{basic_conv_forward.3} parent=0 // pred_check_branch
    %13 = sbr.rel (0) target = $region13
  $region12: #{basic_conv_forward.3} parent=0 // pred_region
    _
  $region13: #{basic_conv_forward.3} parent=0 // pred_fallthru
    _
  %v14 = vld [vmem:[%s1] sm:$0xff]
  %v15 = vld [vmem:[%s2] sm:$0xff]
  %v16 = vld [vmem:[%s0] sm:$0xff]
  %v17 = vld [vmem:[%s0 + $0x8] sm:$0xff]
  %v18 = vld [vmem:[%s0 + $0x10] sm:$0xff]
  %v19 = vld [vmem:[%s0 + $0x18] sm:$0xff]
  %21 = vset.pattern.permute.xlu0 0
  %22 = vperm.xlu0 %21, %v14
  %v23 = vpop.permute.xlu0 %22
  %v25 = vmul.f32 %v16, %v23
  %v26 = vmul.f32 %v17, %v23
  %v27 = vmul.f32 %v18, %v23
  %v28 = vmul.f32 %v19, %v23
  %30 = vset.pattern.permute.xlu0 0
  %31 = vperm.xlu0 %30, %v15
  %v32 = vpop.permute.xlu0 %31
  %v34 = vadd.f32 %v25, %v32
  %v35 = vadd.f32 %v26, %v32
  %v36 = vadd.f32 %v27, %v32
  %v37 = vadd.f32 %v28, %v32
  %v38 = vmax.f32 %v34, 0.0
  %v39 = vmax.f32 %v35, 0.0
  %v40 = vmax.f32 %v36, 0.0
  %v41 = vmax.f32 %v37, 0.0
  %42 = vst [vmem:[%s3] sm:$0xff] %v38
  %43 = vst [vmem:[%s3 + $0x8] sm:$0xff] %v39
  %44 = vst [vmem:[%s3 + $0x10] sm:$0xff] %v40
  %45 = vst [vmem:[%s3 + $0x18] sm:$0xff] %v41
  // Predicated region
  $region14: #{basic_conv_forward.3} parent=0 // pred_check
    _
  $region15: #{basic_conv_forward.3} parent=0 // pred_check_branch
    %47 = sbr.rel (0) target = $region17
  $region16: #{basic_conv_forward.3} parent=0 // pred_region
    _
  $region17: #{basic_conv_forward.3} parent=0 // pred_fallthru
    _
  // Predicated region
  $region18: #{basic_conv_forward.3} parent=0 // pred_check
    _
  $region19: #{basic_conv_forward.3} parent=0 // pred_check_branch
    %49 = sbr.rel (0) target = $region21
  $region20: #{basic_conv_forward.3} parent=0 // pred_region
    _
  $region21: #{basic_conv_forward.3} parent=0 // pred_fallthru
    _

// kernel: basic_conv_forward.2
$region0: #{basic_conv_forward.2}
  #allocation0 [shape = 'u32[]', space=smem, size = 0x4, offset = 0x4, fixed_abs, tag = 'smem constant byte address 0x4 - core index']
  #allocation1 [shape = 'u32[72,128]{1,0:T(1,128)}', space=vmem, size = 0x9000, scoped, tag = 'internal scratch']
  %s0 = inlined_call_operand.vmem [shape: bf16[8,48], index: 0, kind: input, shape index: {}]
  %s1 = inlined_call_operand.vmem [shape: bf16[48,512], index: 1, kind: input, shape index: {}]
  %s2 = inlined_call_operand.vmem [shape: f32[8,512], index: 2, kind: output, shape index: {0}]
  %s3 = inlined_call_operand.vmem [shape: f32[16,128], index: 3, kind: output, shape index: {1}]
  %4 = xla_tuple %s2, %s3
  %s5 = sld [smem:[#allocation0]]
  $region30: #{basic_conv_forward.2} parent=0
    _
  %s7 = ssub.s32 1, %s5
  %s8 = scalar_select 0, %s7, %s5
  // Predicated region
  $region2: #{basic_conv_forward.2} parent=0 // pred_check
    _
  $region3: #{basic_conv_forward.2} parent=0 // pred_check_branch
    %10 = sbr.rel (0) target = $region5
  $region4: #{basic_conv_forward.2} parent=0 // pred_region
    _
  $region5: #{basic_conv_forward.2} parent=0 // pred_fallthru
    _
  // Predicated region
  $region6: #{basic_conv_forward.2} parent=0 // pred_check
    _
  $region7: #{basic_conv_forward.2} parent=0 // pred_check_branch
    %12 = sbr.rel (0) target = $region9
  $region8: #{basic_conv_forward.2} parent=0 // pred_region
    %s13 = sadd.s32 0, 0
    %s14 = smul.u32 4, %s13
    %p15 = scmp.lt.s32.totalorder %s14, 3
    %s16 = scalar_select %p15, %s14, 3
    %s17 = smul.addr %s16, 4
    %s18 = scalar_lea.vmem %s1, %s17
    %s19 = sadd.s32 0, 0
    %s20 = smul.u32 4, %s19
  $region9: #{basic_conv_forward.2} parent=0 // pred_fallthru
    _
  %s21 = sadd.s32 0, 0
  %s22 = smul.u32 4, %s21
  %p23 = scmp.lt.s32.totalorder %s22, 3
  %s24 = scalar_select %p23, %s22, 3
  %s25 = smul.addr %s24, 4
  %s26 = scalar_lea.vmem %s1, %s25
  %s27 = sadd.s32 0, 0
  %s28 = smul.u32 4, %s27
  %p29 = scmp.lt.s32.totalorder %s28, 3
  %s30 = scalar_select %p29, %s28, 3
  %s31 = smul.addr %s30, 8
  %s32 = scalar_lea.vmem %s2, %s31
  %s33 = sadd.s32 0, 0
  %s34 = smul.u32 4, %s33
  %p35 = scmp.lt.s32.totalorder %s34, 3
  %s36 = scalar_select %p35, %s34, 3
  %s37 = smul.addr %s36, 4
  %s38 = scalar_lea.vmem %s1, %s37
  %s39 = sadd.s32 0, 0
  %s40 = smul.u32 4, %s39
  %s41 = sadd.s32 0, 0
  %s42 = smul.u32 4, %s41
  %p43 = scmp.lt.s32.totalorder %s42, 3
  %s44 = scalar_select %p43, %s42, 3
  %s45 = smul.addr %s44, 8
  %s46 = scalar_lea.vmem %s2, %s45
  %s47 = sadd.s32 0, 0
  %s48 = smul.u32 4, %s47
  %p50 = scmp.eq.s32.totalorder 0, 0
  // Predicated region
  $region10: #{basic_conv_forward.2} parent=0 // pred_check
    %p51 = pneg %p50
  $region11: #{basic_conv_forward.2} parent=0 // pred_check_branch
    %53 = sbr.rel (%p51) target = $region13
  $region12: #{basic_conv_forward.2} parent=0 // pred_region
    %54 = vst [vmem:[%s3] sm:$0xff] 0.0
    %55 = vst [vmem:[%s3 + $0x8] sm:$0xff] 0.0
  $region13: #{basic_conv_forward.2} parent=0 // pred_fallthru
    _
  %v56 = vld [vmem:[%s0] sm:$0xf]
  %v57 = vld [vmem:[%s38] sm:$0xff]
  %v58 = vld [vmem:[%s38 + $0x8] sm:$0xff]
  %v59 = vld [vmem:[%s38 + $0x10] sm:$0xff]
  %v60 = vld [vmem:[%s38 + $0x18] sm:$0xff]
  %v61 = vld [vmem:[%s38 + $0x20] sm:$0xff]
  %v62 = vld [vmem:[%s38 + $0x28] sm:$0xff]
  %v63 = vld [vmem:[%s38 + $0x30] sm:$0xff]
  %v64 = vld [vmem:[%s38 + $0x38] sm:$0xff]
  %v65 = vld [vmem:[%s38 + $0x40] sm:$0xff]
  %v66 = vld [vmem:[%s38 + $0x48] sm:$0xff]
  %v67 = vld [vmem:[%s38 + $0x50] sm:$0xff]
  %v68 = vld [vmem:[%s38 + $0x58] sm:$0xff]
  %v81 = vunpack.c.l.b16 %v57
  %v82 = vunpack.c.h.b16 %v57
  %v83 = vunpack.c.l.b16 %v58
  %v84 = vunpack.c.h.b16 %v58
  %v85 = vunpack.c.l.b16 %v59
  %v86 = vunpack.c.h.b16 %v59
  %v87 = vunpack.c.l.b16 %v60
  %v88 = vunpack.c.h.b16 %v60
  %v89 = vunpack.c.l.b16 %v61
  %v90 = vunpack.c.h.b16 %v61
  %v91 = vunpack.c.l.b16 %v62
  %v92 = vunpack.c.h.b16 %v62
  %v93 = vunpack.c.l.b16 %v63
  %v94 = vunpack.c.h.b16 %v63
  %v95 = vunpack.c.l.b16 %v64
  %v96 = vunpack.c.h.b16 %v64
  %v97 = vunpack.c.l.b16 %v65
  %v98 = vunpack.c.h.b16 %v65
  %v99 = vunpack.c.l.b16 %v66
  %v100 = vunpack.c.h.b16 %v66
  %v101 = vunpack.c.l.b16 %v67
  %v102 = vunpack.c.h.b16 %v67
  %v103 = vunpack.c.l.b16 %v68
  %v104 = vunpack.c.h.b16 %v68
  %v105 = vpack.c.b16 %v85, %v81
  %v106 = vpack.c.b16 %v86, %v82
  %v107 = vpack.c.b16 %v87, %v83
  %v108 = vpack.c.b16 %v88, %v84
  %v109 = vpack.c.b16 %v93, %v89
  %v110 = vpack.c.b16 %v94, %v90
  %v111 = vpack.c.b16 %v95, %v91
  %v112 = vpack.c.b16 %v96, %v92
  %v113 = vpack.c.b16 %v101, %v97
  %v114 = vpack.c.b16 %v102, %v98
  %v115 = vpack.c.b16 %v103, %v99
  %v116 = vpack.c.b16 %v104, %v100
  %vm129 = vcmask 392192
  %v131 = vsel %vm129, %v56, 0
  %133 = vmatpush.bf16.msra.mxu0 0
  %134 = vmatpush.bf16.msra.mxu0 0
  %135 = vmatpush.bf16.msra.mxu0 0
  %136 = vmatpush.bf16.msra.mxu0 0
  %137 = vmatpush.bf16.msra.mxu0 0
  %138 = vmatpush.bf16.msra.mxu0 %v113
  %139 = vmatpush.bf16.msra.mxu0 %v109
  %140 = vmatpush.bf16.msra.mxu0 %v105
  %141 = vmatmul.bf16.gmra.mxu0 %v131
  %v142 = vpop.f32.mrf.mxu0
  %v143 = vadd.f32 0.0, %v142
  %v144 = vpop.f32.mrf.mxu0
  %145 = vdwg.mxu0
  %146 = vmatpush.bf16.msra.mxu0 0
  %147 = vmatpush.bf16.msra.mxu0 0
  %148 = vmatpush.bf16.msra.mxu0 0
  %149 = vmatpush.bf16.msra.mxu0 0
  %150 = vmatpush.bf16.msra.mxu0 0
  %151 = vmatpush.bf16.msra.mxu0 %v114
  %152 = vmatpush.bf16.msra.mxu0 %v110
  %153 = vmatpush.bf16.msra.mxu0 %v106
  %154 = vmatmul.bf16.gmra.mxu0 %v131
  %v155 = vpop.f32.mrf.mxu0
  %v156 = vadd.f32 0.0, %v155
  %v157 = vpop.f32.mrf.mxu0
  %158 = vdwg.mxu0
  %159 = vmatpush.bf16.msra.mxu0 0
  %160 = vmatpush.bf16.msra.mxu0 0
  %161 = vmatpush.bf16.msra.mxu0 0
  %162 = vmatpush.bf16.msra.mxu0 0
  %163 = vmatpush.bf16.msra.mxu0 0
  %164 = vmatpush.bf16.msra.mxu0 %v115
  %165 = vmatpush.bf16.msra.mxu0 %v111
  %166 = vmatpush.bf16.msra.mxu0 %v107
  %167 = vmatmul.bf16.gmra.mxu0 %v131
  %v168 = vpop.f32.mrf.mxu0
  %v169 = vadd.f32 0.0, %v168
  %v170 = vpop.f32.mrf.mxu0
  %171 = vdwg.mxu0
  %172 = vmatpush.bf16.msra.mxu0 0
  %173 = vmatpush.bf16.msra.mxu0 0
  %174 = vmatpush.bf16.msra.mxu0 0
  %175 = vmatpush.bf16.msra.mxu0 0
  %176 = vmatpush.bf16.msra.mxu0 0
  %177 = vmatpush.bf16.msra.mxu0 %v116
  %178 = vmatpush.bf16.msra.mxu0 %v112
  %179 = vmatpush.bf16.msra.mxu0 %v108
  %180 = vmatmul.bf16.gmra.mxu0 %v131
  %v181 = vpop.f32.mrf.mxu0
  %v182 = vadd.f32 0.0, %v181
  %v183 = vpop.f32.mrf.mxu0
  %184 = vdwg.mxu0
  %185 = vst [vmem:[%s46] sm:$0xff] %v143
  %186 = vst [vmem:[%s46 + $0x8] sm:$0xff] %v156
  %187 = vst [vmem:[%s46 + $0x10] sm:$0xff] %v169
  %188 = vst [vmem:[%s46 + $0x18] sm:$0xff] %v182
  %v189 = vld [vmem:[%s3] sm:$0xff]
  %v190 = vld [vmem:[%s3 + $0x8] sm:$0xff]
  %v191 = vadd.f32 %v189, %v143
  %v192 = vmul.f32 %v143, %v143
  %v193 = vadd.f32 %v190, %v192
  %v194 = vadd.f32 %v191, %v156
  %v195 = vmul.f32 %v156, %v156
  %v196 = vadd.f32 %v193, %v195
  %v197 = vadd.f32 %v194, %v169
  %v198 = vmul.f32 %v169, %v169
  %v199 = vadd.f32 %v196, %v198
  %v200 = vadd.f32 %v197, %v182
  %v201 = vmul.f32 %v182, %v182
  %v202 = vadd.f32 %v199, %v201
  %203 = vst [vmem:[%s3] sm:$0xff] %v200
  %204 = vst [vmem:[%s3 + $0x8] sm:$0xff] %v202
  %s205 = sadd.s32 0, 0
  %s206 = smul.u32 4, %s205
  %p207 = scmp.lt.s32.totalorder %s206, 3
  %s208 = scalar_select %p207, %s206, 3
  %s209 = smul.addr %s208, 8
  %s210 = scalar_lea.vmem %s2, %s209
  // Predicated region
  $region14: #{basic_conv_forward.2} parent=0 // pred_check
    _
  $region15: #{basic_conv_forward.2} parent=0 // pred_check_branch
    %212 = sbr.rel (0) target = $region17
  $region16: #{basic_conv_forward.2} parent=0 // pred_region
    %s213 = sadd.s32 0, 0
    %s214 = smul.u32 4, %s213
  $region17: #{basic_conv_forward.2} parent=0 // pred_fallthru
    _
  // Predicated region
  $region18: #{basic_conv_forward.2} parent=0 // pred_check
    _
  $region19: #{basic_conv_forward.2} parent=0 // pred_check_branch
    %216 = sbr.rel (0) target = $region21
  $region20: #{basic_conv_forward.2} parent=0 // pred_region
    _
  $region21: #{basic_conv_forward.2} parent=0 // pred_fallthru
    _
  // Predicated region
  $region22: #{basic_conv_forward.2} parent=0 // pred_check
    _
  $region23: #{basic_conv_forward.2} parent=0 // pred_check_branch
    %218 = sbr.rel (0) target = $region25
  $region24: #{basic_conv_forward.2} parent=0 // pred_region
    %s219 = sadd.s32 0, 0
    %s220 = smul.u32 4, %s219
    %p221 = scmp.lt.s32.totalorder %s220, 3
    %s222 = scalar_select %p221, %s220, 3
    %s223 = smul.addr %s222, 8
    %s224 = scalar_lea.vmem %s2, %s223
  $region25: #{basic_conv_forward.2} parent=0 // pred_fallthru
    _
  // Predicated region
  $region26: #{basic_conv_forward.2} parent=0 // pred_check
    _
  $region27: #{basic_conv_forward.2} parent=0 // pred_check_branch
    %226 = sbr.rel (0) target = $region29
  $region28: #{basic_conv_forward.2} parent=0 // pred_region
    _
  $region29: #{basic_conv_forward.2} parent=0 // pred_fallthru
    _

</llo_original>
